<compile_context>
chip_gen: v6e
topology: v6e:2x2x1
jax: 0.10.0
libtpu: 0.0.40
codegen_flags: <defaults>
</compile_context>

<pallas_src>
import jax
import jax.numpy as jnp
from jax.experimental import pallas as pl
from jax.experimental.pallas import tpu as pltpu


_LANE = 128


def _round_up(x, m):
    return (x + m - 1) // m * m


def _pad2d(a, rows, cols):
    r, c = a.shape
    if r == rows and c == cols:
        return a
    return jnp.pad(a, ((0, rows - r), (0, cols - c)))


def _device_info():
    """Per-core VMEM capacity (bytes) and TensorCores per chip."""
    try:
        vmem_cap = int(pltpu.get_tpu_info().vmem_capacity_bytes)
    except Exception:
        vmem_cap = 0
    if vmem_cap <= 0:
        vmem_cap = 64 << 20          # conservative fallback (v7x per-TC)
    kind = ""
    try:
        kind = jax.devices()[0].device_kind.lower()
    except Exception:
        pass
    n_tc = 2 if ("v7" in kind or "7x" in kind) else 1
    return vmem_cap, n_tc


def autoencoder_kernel(x_ref,
                       w1_ref, b1_ref,
                       w2_ref, b2_ref,
                       w3_ref, b3_ref,
                       w4_ref, b4_ref,
                       out_ref):
    x = x_ref[...]

    # Encoder: Linear(D, 32) -> ReLU -> Linear(32, bneck)   (H/B lane-padded)
    h1 = jnp.maximum(
        jnp.dot(x, w1_ref[...], preferred_element_type=jnp.float32)
        + b1_ref[...], 0.0)
    z = (jnp.dot(h1.astype(w2_ref.dtype), w2_ref[...],
                 preferred_element_type=jnp.float32) + b2_ref[...])

    # Decoder: Linear(bneck, 32) -> ReLU -> Linear(32, D)
    h2 = jnp.maximum(
        jnp.dot(z.astype(w3_ref.dtype), w3_ref[...],
                preferred_element_type=jnp.float32) + b3_ref[...], 0.0)
    y = (jnp.dot(h2.astype(w4_ref.dtype), w4_ref[...],
                 preferred_element_type=jnp.float32) + b4_ref[...])

    out_ref[...] = y.astype(out_ref.dtype)


def autoencoder_forward(x, params, *, tm=None, stream_dtype=None):
    """x: (N, D). params: PyTorch-convention weights (out, in), biases (out,).

    tm: optional upper bound on the batch tile (default: VMEM-derived cap).
    stream_dtype: optionally stream the input as e.g. jnp.bfloat16 — only
      worthwhile if x already lives in HBM in that dtype; output stays x.dtype.
    """
    N, D = x.shape
    H = params["b1"].shape[0]        # hidden width (32)
    B = params["b2"].shape[0]        # bottleneck width

    # Only internal (weight-side) dims are padded to lane multiples; the
    # streamed I/O dim D stays as-is. Zero padding is exact: padded hidden /
    # bottleneck columns stay identically zero through ReLU and later matmuls.
    Hp = _round_up(H, _LANE)
    Bp = _round_up(B, _LANE)

    io_dtype = jnp.dtype(stream_dtype) if stream_dtype is not None else x.dtype
    out_dtype = x.dtype              # write final dtype directly from kernel
    xp = x if x.dtype == io_dtype else x.astype(io_dtype)

    # Weights are tiny and VMEM-resident. Match the streaming dtype when it is
    # bf16 so the MXU takes its native bf16 path; f32 otherwise. Biases stay
    # f32 (added to the f32 accumulators).
    w_dtype = jnp.bfloat16 if io_dtype == jnp.bfloat16 else jnp.float32
    w1 = _pad2d(params["w1"].T.astype(w_dtype), D, Hp)    # (D,  Hp)
    w2 = _pad2d(params["w2"].T.astype(w_dtype), Hp, Bp)   # (Hp, Bp)
    w3 = _pad2d(params["w3"].T.astype(w_dtype), Bp, Hp)   # (Bp, Hp)
    w4 = _pad2d(params["w4"].T.astype(w_dtype), Hp, D)    # (Hp, D)
    b1 = _pad2d(params["b1"].astype(jnp.float32)[None, :], 1, Hp)
    b2 = _pad2d(params["b2"].astype(jnp.float32)[None, :], 1, Bp)
    b3 = _pad2d(params["b3"].astype(jnp.float32)[None, :], 1, Hp)
    b4 = params["b4"].astype(jnp.float32)[None, :]         # (1, D)

    in_item = jnp.dtype(io_dtype).itemsize
    out_item = jnp.dtype(out_dtype).itemsize
    # Sublane granularity of the batch tile is dtype-dependent (rows pack).
    sub = max(8, 32 // in_item)      # 8 for f32, 16 for bf16, 32 for 8-bit

    vmem_cap, n_tc = _device_info()
    weight_bytes = sum(int(a.size) * a.dtype.itemsize
                       for a in (w1, w2, w3, w4, b1, b2, b3, b4))

    # Bytes per batch-tile row:
    #   I/O streams (double-buffered): 2*x + 2*out
    #   f32 in-kernel intermediates:   h1, z, h2, y  (+ f32 promo of bf16 x)
    io_row = 2 * D * in_item + 2 * D * out_item
    compute_row = 4 * (Hp + Bp + Hp + D) + (4 * D if in_item < 4 else 0)
    row_bytes = io_row + compute_row

    # Generation-specific tile budget: ~3/8 of per-core VMEM
    # (≈24 MiB on v7x's 64 MiB, ≈48 MiB on v5e/v6e's 128 MiB).
    budget = (vmem_cap * 3) // 8 - 2 * weight_bytes
    tm_cap = max(sub, budget // row_bytes)

    tm_eff = tm_cap if tm is None else min(int(tm), tm_cap)
    # On multi-TensorCore chips keep >=2 blocks so the "parallel" batch axis
    # can shard across cores.
    if n_tc > 1 and N > sub * n_tc:
        tm_eff = min(tm_eff, _round_up(pl.cdiv(N, n_tc), sub))
    tm_eff = min(tm_eff, _round_up(N, sub))
    if N <= sub:
        tm_eff = N                    # block dim == full array dim is legal
    else:
        tm_eff = max(sub, (tm_eff // sub) * sub)

    grid = (pl.cdiv(N, tm_eff),)

    vmem_limit = int(min(vmem_cap,
                         max(32 << 20,
                             tm_eff * row_bytes + 2 * weight_bytes + (4 << 20))))

    def full2d(arr):
        return pl.BlockSpec(arr.shape, lambda i: (0, 0))

    out = pl.pallas_call(
        autoencoder_kernel,
        out_shape=jax.ShapeDtypeStruct((N, D), out_dtype),
        grid_spec=pl.GridSpec(
            grid=grid,
            in_specs=[
                pl.BlockSpec((tm_eff, D), lambda i: (i, 0)),   # x batch tile
                full2d(w1), full2d(b1),
                full2d(w2), full2d(b2),
                full2d(w3), full2d(b3),
                full2d(w4), full2d(b4),
            ],
            out_specs=pl.BlockSpec((tm_eff, D), lambda i: (i, 0)),
        ),
        compiler_params=pltpu.CompilerParams(
            dimension_semantics=("parallel",),
            vmem_limit_bytes=vmem_limit,
        ),
    )(xp, w1, b1, w2, b2, w3, b3, w4, b4)
    return out


def init_params(key, input_size, bneck_size, hidden=32):
    """Deterministic init mimicking nn.Linear U(-1/sqrt(fan_in), 1/sqrt(fan_in))."""
    ks = jax.random.split(key, 8)

    def lin(kw, kb, out_f, in_f):
        bound = 1.0 / jnp.sqrt(in_f)
        w = jax.random.uniform(kw, (out_f, in_f), jnp.float32, -bound, bound)
        b = jax.random.uniform(kb, (out_f,), jnp.float32, -bound, bound)
        return w, b

    w1, b1 = lin(ks[0], ks[1], hidden, input_size)
    w2, b2 = lin(ks[2], ks[3], bneck_size, hidden)
    w3, b3 = lin(ks[4], ks[5], hidden, bneck_size)
    w4, b4 = lin(ks[6], ks[7], input_size, hidden)
    return {"w1": w1, "b1": b1, "w2": w2, "b2": b2,
            "w3": w3, "b3": b3, "w4": w4, "b4": b4}


def autoencoder_ref(x, p):
    h = jnp.maximum(x @ p["w1"].T + p["b1"], 0.0)
    z = h @ p["w2"].T + p["b2"]
    h = jnp.maximum(z @ p["w3"].T + p["b3"], 0.0)
    return h @ p["w4"].T + p["b4"]


# TODO(synk): train_encoder (Adam / MSELoss training loop) is host-side
# optimization logic, not part of the forward pass — not translated.

if __name__ == "__main__":
    key = jax.random.PRNGKey(0)
    k_x, k_p = jax.random.split(key)

    N, D, BNECK = 16, 16, 4          # batch=16, input_size=16, bottleneck=4
    x = jax.random.normal(k_x, (N, D), jnp.float32)
    params = init_params(k_p, D, BNECK)

    out = jax.block_until_ready(autoencoder_forward(x, params))

    ref = autoencoder_ref(x, params)
    assert out.shape == (N, D) and out.dtype == jnp.float32
    assert jnp.allclose(out, ref, atol=1e-4, rtol=1e-4), "mismatch vs reference"

    print("KERNEL_OK")
</pallas_src>

<mosaic_0001>
module attributes {stable_mosaic.version = 11 : i64} {
  func.func @autoencoder_kernel(%arg0: i32, %arg1: memref<16x16xf32, #tpu.memory_space<vmem>>, %arg2: memref<16x128xf32, #tpu.memory_space<vmem>>, %arg3: memref<1x128xf32, #tpu.memory_space<vmem>>, %arg4: memref<128x128xf32, #tpu.memory_space<vmem>>, %arg5: memref<1x128xf32, #tpu.memory_space<vmem>>, %arg6: memref<128x128xf32, #tpu.memory_space<vmem>>, %arg7: memref<1x128xf32, #tpu.memory_space<vmem>>, %arg8: memref<128x16xf32, #tpu.memory_space<vmem>>, %arg9: memref<1x16xf32, #tpu.memory_space<vmem>>, %arg10: memref<16x16xf32, #tpu.memory_space<vmem>>) attributes {dimension_semantics = [#tpu.dimension_semantics<parallel>], iteration_bounds = array<i64: 1>, scalar_prefetch = 0 : i64, scratch_operands = 0 : i64, tpu.core_type = #tpu.core_type<tc>, window_params = [{transform_indices = @transform_0, window_bounds = array<i64: 16, 16>}, {pipeline_mode = #tpu.pipeline_mode<synchronous>, transform_indices = @transform_1, window_bounds = array<i64: 16, 128>}, {pipeline_mode = #tpu.pipeline_mode<synchronous>, transform_indices = @transform_2, window_bounds = array<i64: 1, 128>}, {pipeline_mode = #tpu.pipeline_mode<synchronous>, transform_indices = @transform_3, window_bounds = array<i64: 128, 128>}, {pipeline_mode = #tpu.pipeline_mode<synchronous>, transform_indices = @transform_4, window_bounds = array<i64: 1, 128>}, {pipeline_mode = #tpu.pipeline_mode<synchronous>, transform_indices = @transform_5, window_bounds = array<i64: 128, 128>}, {pipeline_mode = #tpu.pipeline_mode<synchronous>, transform_indices = @transform_6, window_bounds = array<i64: 1, 128>}, {pipeline_mode = #tpu.pipeline_mode<synchronous>, transform_indices = @transform_7, window_bounds = array<i64: 128, 16>}, {pipeline_mode = #tpu.pipeline_mode<synchronous>, transform_indices = @transform_8, window_bounds = array<i64: 1, 16>}, {transform_indices = @transform_9, window_bounds = array<i64: 16, 16>}]} {
    %c0 = arith.constant 0 : index
    %c0_0 = arith.constant 0 : index
    %0 = vector.load %arg1[%c0, %c0_0] : memref<16x16xf32, #tpu.memory_space<vmem>>, vector<16x16xf32>
    %c0_1 = arith.constant 0 : index
    %c0_2 = arith.constant 0 : index
    %1 = vector.load %arg2[%c0_1, %c0_2] : memref<16x128xf32, #tpu.memory_space<vmem>>, vector<16x128xf32>
    %cst = arith.constant dense<0.000000e+00> : vector<16x128xf32>
    %2 = tpu.matmul %0, %1, %cst {dimension_numbers = #tpu.dot_dimension_numbers<[1], [0], [0], [1], [0, 0, 1, 1], [], []>} : vector<16x16xf32>, vector<16x128xf32>, vector<16x128xf32> -> vector<16x128xf32>
    %c0_3 = arith.constant 0 : index
    %c0_4 = arith.constant 0 : index
    %3 = vector.load %arg3[%c0_3, %c0_4] : memref<1x128xf32, #tpu.memory_space<vmem>>, vector<1x128xf32>
    %4 = vector.broadcast %3 : vector<1x128xf32> to vector<16x128xf32>
    %5 = arith.addf %2, %4 : vector<16x128xf32>
    %cst_5 = arith.constant 0.000000e+00 : f32
    %6 = vector.broadcast %cst_5 : f32 to vector<16x128xf32>
    %7 = arith.maximumf %5, %6 : vector<16x128xf32>
    %c0_6 = arith.constant 0 : index
    %c0_7 = arith.constant 0 : index
    %8 = vector.load %arg4[%c0_6, %c0_7] : memref<128x128xf32, #tpu.memory_space<vmem>>, vector<128x128xf32>
    %cst_8 = arith.constant dense<0.000000e+00> : vector<16x128xf32>
    %9 = tpu.matmul %7, %8, %cst_8 {dimension_numbers = #tpu.dot_dimension_numbers<[1], [0], [0], [1], [0, 0, 1, 1], [], []>} : vector<16x128xf32>, vector<128x128xf32>, vector<16x128xf32> -> vector<16x128xf32>
    %c0_9 = arith.constant 0 : index
    %c0_10 = arith.constant 0 : index
    %10 = vector.load %arg5[%c0_9, %c0_10] : memref<1x128xf32, #tpu.memory_space<vmem>>, vector<1x128xf32>
    %11 = vector.broadcast %10 : vector<1x128xf32> to vector<16x128xf32>
    %12 = arith.addf %9, %11 : vector<16x128xf32>
    %c0_11 = arith.constant 0 : index
    %c0_12 = arith.constant 0 : index
    %13 = vector.load %arg6[%c0_11, %c0_12] : memref<128x128xf32, #tpu.memory_space<vmem>>, vector<128x128xf32>
    %cst_13 = arith.constant dense<0.000000e+00> : vector<16x128xf32>
    %14 = tpu.matmul %12, %13, %cst_13 {dimension_numbers = #tpu.dot_dimension_numbers<[1], [0], [0], [1], [0, 0, 1, 1], [], []>} : vector<16x128xf32>, vector<128x128xf32>, vector<16x128xf32> -> vector<16x128xf32>
    %c0_14 = arith.constant 0 : index
    %c0_15 = arith.constant 0 : index
    %15 = vector.load %arg7[%c0_14, %c0_15] : memref<1x128xf32, #tpu.memory_space<vmem>>, vector<1x128xf32>
    %16 = vector.broadcast %15 : vector<1x128xf32> to vector<16x128xf32>
    %17 = arith.addf %14, %16 : vector<16x128xf32>
    %cst_16 = arith.constant 0.000000e+00 : f32
    %18 = vector.broadcast %cst_16 : f32 to vector<16x128xf32>
    %19 = arith.maximumf %17, %18 : vector<16x128xf32>
    %c0_17 = arith.constant 0 : index
    %c0_18 = arith.constant 0 : index
    %20 = vector.load %arg8[%c0_17, %c0_18] : memref<128x16xf32, #tpu.memory_space<vmem>>, vector<128x16xf32>
    %cst_19 = arith.constant dense<0.000000e+00> : vector<16x16xf32>
    %21 = tpu.matmul %19, %20, %cst_19 {dimension_numbers = #tpu.dot_dimension_numbers<[1], [0], [0], [1], [0, 0, 1, 1], [], []>} : vector<16x128xf32>, vector<128x16xf32>, vector<16x16xf32> -> vector<16x16xf32>
    %c0_20 = arith.constant 0 : index
    %c0_21 = arith.constant 0 : index
    %22 = vector.load %arg9[%c0_20, %c0_21] : memref<1x16xf32, #tpu.memory_space<vmem>>, vector<1x16xf32>
    %23 = vector.broadcast %22 : vector<1x16xf32> to vector<16x16xf32>
    %24 = arith.addf %21, %23 : vector<16x16xf32>
    %c0_22 = arith.constant 0 : index
    %c0_23 = arith.constant 0 : index
    %25 = vector.load %arg10[%c0_22, %c0_23] : memref<16x16xf32, #tpu.memory_space<vmem>>, vector<16x16xf32>
    tpu.vector_store %arg10[%c0_22, %c0_23], %24 {strides = array<i32>} : memref<16x16xf32, #tpu.memory_space<vmem>>, vector<16x16xf32>,
    return
  }
  func.func @transform_0(%arg0: i32) -> (i32, i32) {
    %c0_i32 = arith.constant 0 : i32
    %c0_i32_0 = arith.constant 0 : i32
    return %arg0, %c0_i32 : i32, i32
  }
  func.func @transform_1(%arg0: i32) -> (i32, i32) {
    %c0_i32 = arith.constant 0 : i32
    %c0_i32_0 = arith.constant 0 : i32
    %c0_i32_1 = arith.constant 0 : i32
    return %c0_i32, %c0_i32_0 : i32, i32
  }
  func.func @transform_2(%arg0: i32) -> (i32, i32) {
    %c0_i32 = arith.constant 0 : i32
    %c0_i32_0 = arith.constant 0 : i32
    %c0_i32_1 = arith.constant 0 : i32
    return %c0_i32, %c0_i32_0 : i32, i32
  }
  func.func @transform_3(%arg0: i32) -> (i32, i32) {
    %c0_i32 = arith.constant 0 : i32
    %c0_i32_0 = arith.constant 0 : i32
    %c0_i32_1 = arith.constant 0 : i32
    return %c0_i32, %c0_i32_0 : i32, i32
  }
  func.func @transform_4(%arg0: i32) -> (i32, i32) {
    %c0_i32 = arith.constant 0 : i32
    %c0_i32_0 = arith.constant 0 : i32
    %c0_i32_1 = arith.constant 0 : i32
    return %c0_i32, %c0_i32_0 : i32, i32
  }
  func.func @transform_5(%arg0: i32) -> (i32, i32) {
    %c0_i32 = arith.constant 0 : i32
    %c0_i32_0 = arith.constant 0 : i32
    %c0_i32_1 = arith.constant 0 : i32
    return %c0_i32, %c0_i32_0 : i32, i32
  }
  func.func @transform_6(%arg0: i32) -> (i32, i32) {
    %c0_i32 = arith.constant 0 : i32
    %c0_i32_0 = arith.constant 0 : i32
    %c0_i32_1 = arith.constant 0 : i32
    return %c0_i32, %c0_i32_0 : i32, i32
  }
  func.func @transform_7(%arg0: i32) -> (i32, i32) {
    %c0_i32 = arith.constant 0 : i32
    %c0_i32_0 = arith.constant 0 : i32
    %c0_i32_1 = arith.constant 0 : i32
    return %c0_i32, %c0_i32_0 : i32, i32
  }
  func.func @transform_8(%arg0: i32) -> (i32, i32) {
    %c0_i32 = arith.constant 0 : i32
    %c0_i32_0 = arith.constant 0 : i32
    %c0_i32_1 = arith.constant 0 : i32
    return %c0_i32, %c0_i32_0 : i32, i32
  }
  func.func @transform_9(%arg0: i32) -> (i32, i32) {
    %c0_i32 = arith.constant 0 : i32
    %c0_i32_0 = arith.constant 0 : i32
    return %arg0, %c0_i32 : i32, i32
  }
}

</mosaic_0001>

<llo_original>
// kernel: tpu_custom_call.1
$region0: #{tpu_custom_call.1}
  #allocation0 [shape = 'u32[]', space=smem, size = 0x4, offset = 0x4, fixed_abs, tag = 'smem constant byte address 0x4 - core index']
  #allocation1 [shape = 'u32[144,128]{1,0:T(1,128)}', space=vmem, size = 0x12000, scoped, tag = 'internal scratch']
  %s0 = inlined_call_operand.vmem [shape: f32[16,16], index: 0, kind: input, shape index: {}]
  %s1 = inlined_call_operand.hbm [shape: f32[16,128], index: 1, kind: input, shape index: {}]
  %s2 = inlined_call_operand.vmem [shape: f32[1,128], index: 2, kind: input, shape index: {}]
  %s3 = inlined_call_operand.vmem [shape: f32[128,128], index: 3, kind: input, shape index: {}]
  %s4 = inlined_call_operand.vmem [shape: f32[1,128], index: 4, kind: input, shape index: {}]
  %s5 = inlined_call_operand.hbm [shape: f32[128,128], index: 5, kind: input, shape index: {}]
  %s6 = inlined_call_operand.vmem [shape: f32[1,128], index: 6, kind: input, shape index: {}]
  %s7 = inlined_call_operand.vmem [shape: f32[128,16], index: 7, kind: input, shape index: {}]
  %s8 = inlined_call_operand.vmem [shape: f32[1,16], index: 8, kind: input, shape index: {}]
  %s9 = inlined_call_operand.hbm [shape: f32[16,16], index: 9, kind: output, shape index: {}]
  %s10 = sld [smem:[#allocation0]]
  $region54: #{tpu_custom_call.1} parent=0
    _
  %s12 = ssub.s32 1, %s10
  %s13 = scalar_select 0, %s12, %s10
  $region1: #{tpu_custom_call.1} parent=0
    #allocation2 [shape = 'u8[8192]{0}', space=vmem, size = 0x2000, scoped, tag = 'input window, operand 1, single buffered']
    #allocation3 [shape = 's32[1]{0}', space=sflag, size = 0x4, scoped, tag = 'scoped memory for tpu_custom_call.1']
    #allocation4 [shape = 's32[1]{0}', space=sflag, size = 0x4, scoped, tag = 'scoped memory for tpu_custom_call.1']
    #allocation5 [shape = 'u8[65536]{0}', space=vmem, size = 0x10000, scoped, tag = 'input window, operand 5, single buffered']
    #allocation6 [shape = 's32[1]{0}', space=sflag, size = 0x4, scoped, tag = 'scoped memory for tpu_custom_call.1']
    #allocation7 [shape = 'u8[8192]{0}', space=vmem, size = 0x2000, scoped, tag = 'output window, operand 0, single buffered']
    %14 = vsyncpa [#allocation3], 0
    %15 = vsyncpa [#allocation6], 0
    %16 = vsyncpa [#allocation4], 0
    // Predicated region
    $region2: #{tpu_custom_call.1} parent=1 // pred_check
      _
    $region3: #{tpu_custom_call.1} parent=1 // pred_check_branch
      %18 = sbr.rel (0) target = $region5
    $region4: #{tpu_custom_call.1} parent=1 // pred_region
      _
    $region5: #{tpu_custom_call.1} parent=1 // pred_fallthru
      _
    // Predicated region
    $region6: #{tpu_custom_call.1} parent=1 // pred_check
      _
    $region7: #{tpu_custom_call.1} parent=1 // pred_check_branch
      %20 = sbr.rel (0) target = $region9
    $region8: #{tpu_custom_call.1} parent=1 // pred_region
      %s22 = ssub.s32 256, 256
      %23 = vsyncadd [#allocation3], %s22
      %s24 = sshll.u32 [#allocation2], 4
      %s25 = int_to_ptr.vmem [resolvable:$true] %s24
      %30 = dma.hbm_to_vmem [thread:$0]  %s1, 256, %s25, [#allocation3], 128, 128, 8
    $region9: #{tpu_custom_call.1} parent=1 // pred_fallthru
      _
    // Predicated region
    $region10: #{tpu_custom_call.1} parent=1 // pred_check
      _
    $region11: #{tpu_custom_call.1} parent=1 // pred_check_branch
      %32 = sbr.rel (0) target = $region13
    $region12: #{tpu_custom_call.1} parent=1 // pred_region
      _
    $region13: #{tpu_custom_call.1} parent=1 // pred_fallthru
      _
    // Predicated region
    $region14: #{tpu_custom_call.1} parent=1 // pred_check
      _
    $region15: #{tpu_custom_call.1} parent=1 // pred_check_branch
      %34 = sbr.rel (0) target = $region17
    $region16: #{tpu_custom_call.1} parent=1 // pred_region
      _
    $region17: #{tpu_custom_call.1} parent=1 // pred_fallthru
      _
    // Predicated region
    $region18: #{tpu_custom_call.1} parent=1 // pred_check
      _
    $region19: #{tpu_custom_call.1} parent=1 // pred_check_branch
      %36 = sbr.rel (0) target = $region21
    $region20: #{tpu_custom_call.1} parent=1 // pred_region
      _
    $region21: #{tpu_custom_call.1} parent=1 // pred_fallthru
      _
    // Predicated region
    $region22: #{tpu_custom_call.1} parent=1 // pred_check
      _
    $region23: #{tpu_custom_call.1} parent=1 // pred_check_branch
      %38 = sbr.rel (0) target = $region25
    $region24: #{tpu_custom_call.1} parent=1 // pred_region
      %s40 = ssub.s32 2048, 2048
      %41 = vsyncadd [#allocation6], %s40
      %s42 = sshll.u32 [#allocation5], 4
      %s43 = int_to_ptr.vmem [resolvable:$true] %s42
      %48 = dma.hbm_to_vmem [thread:$0]  %s5, 2048, %s43, [#allocation6], 128, 128, 8
    $region25: #{tpu_custom_call.1} parent=1 // pred_fallthru
      _
    // Predicated region
    $region26: #{tpu_custom_call.1} parent=1 // pred_check
      _
    $region27: #{tpu_custom_call.1} parent=1 // pred_check_branch
      %50 = sbr.rel (0) target = $region29
    $region28: #{tpu_custom_call.1} parent=1 // pred_region
      _
    $region29: #{tpu_custom_call.1} parent=1 // pred_fallthru
      _
    // Predicated region
    $region30: #{tpu_custom_call.1} parent=1 // pred_check
      _
    $region31: #{tpu_custom_call.1} parent=1 // pred_check_branch
      %52 = sbr.rel (0) target = $region33
    $region32: #{tpu_custom_call.1} parent=1 // pred_region
      _
    $region33: #{tpu_custom_call.1} parent=1 // pred_fallthru
      _
    // Predicated region
    $region34: #{tpu_custom_call.1} parent=1 // pred_check
      _
    $region35: #{tpu_custom_call.1} parent=1 // pred_check_branch
      %54 = sbr.rel (0) target = $region37
    $region36: #{tpu_custom_call.1} parent=1 // pred_region
      _
    $region37: #{tpu_custom_call.1} parent=1 // pred_fallthru
      _
    // Predicated region
    $region38: #{tpu_custom_call.1} parent=1 // pred_check
      _
    $region39: #{tpu_custom_call.1} parent=1 // pred_check_branch
      %56 = sbr.rel (0) target = $region41
    $region40: #{tpu_custom_call.1} parent=1 // pred_region
      %57 = dma.done [#allocation3], 256
    $region41: #{tpu_custom_call.1} parent=1 // pred_fallthru
      _
    // Predicated region
    $region42: #{tpu_custom_call.1} parent=1 // pred_check
      _
    $region43: #{tpu_custom_call.1} parent=1 // pred_check_branch
      %59 = sbr.rel (0) target = $region45
    $region44: #{tpu_custom_call.1} parent=1 // pred_region
      %60 = dma.done [#allocation6], 2048
    $region45: #{tpu_custom_call.1} parent=1 // pred_fallthru
      _
    %v61 = vld [vmem:[%s0] sm:$0xff]
    %v62 = vld [vmem:[%s0 + $0x8] sm:$0xff]
    %v63 = vld [vmem:[#allocation2] sm:$0xff]
    %v64 = vld [vmem:[#allocation2 + $0x8] sm:$0xff]
    %v65 = vld [vmem:[%s2] sm:$0x1]
    %v67 = vlaneseq
    %v68 = vshrl.u32 %v67, 7
    %v69 = vsub.s32 0, %v68
    %v70 = vrot.slane %v65, %v69
    %vm72 = vcmask 130048
    %v74 = vsel %vm72, %v61, 0
    %v77 = vsel %vm72, %v62, 0
    %79 = vmatprep.subr.mxu0 0.0
    %80 = vmatpush1.msra.mxu0 0.0
    %81 = vmatprep.subr.mxu0 0.0
    %82 = vmatpush1.msra.mxu0 0.0
    %83 = vmatprep.subr.mxu0 0.0
    %84 = vmatpush1.msra.mxu0 0.0
    %85 = vmatprep.subr.mxu0 0.0
    %86 = vmatpush1.msra.mxu0 0.0
    %87 = vmatprep.subr.mxu0 0.0
    %88 = vmatpush1.msra.mxu0 0.0
    %89 = vmatprep.subr.mxu0 0.0
    %90 = vmatpush1.msra.mxu0 0.0
    %91 = vmatprep.subr.mxu0 0.0
    %92 = vmatpush1.msra.mxu0 0.0
    %93 = vmatprep.subr.mxu0 0.0
    %94 = vmatpush1.msra.mxu0 0.0
    %95 = vmatprep.subr.mxu0 0.0
    %96 = vmatpush1.msra.mxu0 0.0
    %97 = vmatprep.subr.mxu0 0.0
    %98 = vmatpush1.msra.mxu0 0.0
    %99 = vmatprep.subr.mxu0 0.0
    %100 = vmatpush1.msra.mxu0 0.0
    %101 = vmatprep.subr.mxu0 0.0
    %102 = vmatpush1.msra.mxu0 0.0
    %103 = vmatprep.subr.mxu0 0.0
    %104 = vmatpush1.msra.mxu0 0.0
    %105 = vmatprep.subr.mxu0 0.0
    %106 = vmatpush1.msra.mxu0 0.0
    %107 = vmatprep.subr.mxu0 0.0
    %108 = vmatpush1.msra.mxu0 %v64
    %109 = vmatprep.subr.mxu0 0.0
    %110 = vmatpush1.msra.mxu0 %v63
    %111 = vmatprep.subr.mxu0 0.0
    %112 = vmatpush2.msra.mxu0 0.0
    %113 = vmatprep.subr.mxu0 0.0
    %114 = vmatpush2.msra.mxu0 0.0
    %115 = vmatprep.subr.mxu0 0.0
    %116 = vmatpush2.msra.mxu0 0.0
    %117 = vmatprep.subr.mxu0 0.0
    %118 = vmatpush2.msra.mxu0 0.0
    %119 = vmatprep.subr.mxu0 0.0
    %120 = vmatpush2.msra.mxu0 0.0
    %121 = vmatprep.subr.mxu0 0.0
    %122 = vmatpush2.msra.mxu0 0.0
    %123 = vmatprep.subr.mxu0 0.0
    %124 = vmatpush2.msra.mxu0 0.0
    %125 = vmatprep.subr.mxu0 0.0
    %126 = vmatpush2.msra.mxu0 0.0
    %127 = vmatprep.subr.mxu0 0.0
    %128 = vmatpush2.msra.mxu0 0.0
    %129 = vmatprep.subr.mxu0 0.0
    %130 = vmatpush2.msra.mxu0 0.0
    %131 = vmatprep.subr.mxu0 0.0
    %132 = vmatpush2.msra.mxu0 0.0
    %133 = vmatprep.subr.mxu0 0.0
    %134 = vmatpush2.msra.mxu0 0.0
    %135 = vmatprep.subr.mxu0 0.0
    %136 = vmatpush2.msra.mxu0 0.0
    %137 = vmatprep.subr.mxu0 0.0
    %138 = vmatpush2.msra.mxu0 0.0
    %139 = vmatprep.subr.mxu0 0.0
    %140 = vmatpush2.msra.mxu0 0.0
    %141 = vmatprep.subr.mxu0 0.0
    %142 = vmatpush2.msra.mxu0 0.0
    %143 = vmatprep.mubr.f32.mxu0 0.0
    %144 = vmatmul.mubr.f32.gmra.mxu0 %v74
    %v145 = vpop.f32.mrf.mxu0
    %v146 = vadd.f32 %v70, %v145
    %v147 = vpop.f32.mrf.mxu0
    %148 = vmatprep.mubr.f32.mxu0 0.0
    %149 = vmatmul.mubr.f32.gmra.mxu0 %v77
    %v150 = vpop.f32.mrf.mxu0
    %v151 = vadd.f32 %v70, %v150
    %v152 = vpop.f32.mrf.mxu0
    %153 = vdwg.mxu0
    %v154 = vmax.f32 %v146, 0.0
    %v155 = vmax.f32 %v151, 0.0
    %v156 = vld [vmem:[%s3] sm:$0xff]
    %v157 = vld [vmem:[%s3 + $0x8] sm:$0xff]
    %v158 = vld [vmem:[%s3 + $0x10] sm:$0xff]
    %v159 = vld [vmem:[%s3 + $0x18] sm:$0xff]
    %v160 = vld [vmem:[%s3 + $0x20] sm:$0xff]
    %v161 = vld [vmem:[%s3 + $0x28] sm:$0xff]
    %v162 = vld [vmem:[%s3 + $0x30] sm:$0xff]
    %v163 = vld [vmem:[%s3 + $0x38] sm:$0xff]
    %v164 = vld [vmem:[%s3 + $0x40] sm:$0xff]
    %v165 = vld [vmem:[%s3 + $0x48] sm:$0xff]
    %v166 = vld [vmem:[%s3 + $0x50] sm:$0xff]
    %v167 = vld [vmem:[%s3 + $0x58] sm:$0xff]
    %v168 = vld [vmem:[%s3 + $0x60] sm:$0xff]
    %v169 = vld [vmem:[%s3 + $0x68] sm:$0xff]
    %v170 = vld [vmem:[%s3 + $0x70] sm:$0xff]
    %v171 = vld [vmem:[%s3 + $0x78] sm:$0xff]
    %v172 = vld [vmem:[%s4] sm:$0x1]
    %v174 = vlaneseq
    %v175 = vshrl.u32 %v174, 7
    %v176 = vsub.s32 0, %v175
    %v177 = vrot.slane %v172, %v176
    %179 = vmatprep.subr.mxu0 0.0
    %180 = vmatpush1.msra.mxu0 %v171
    %181 = vmatprep.subr.mxu0 0.0
    %182 = vmatpush1.msra.mxu0 %v170
    %183 = vmatprep.subr.mxu0 0.0
    %184 = vmatpush1.msra.mxu0 %v169
    %185 = vmatprep.subr.mxu0 0.0
    %186 = vmatpush1.msra.mxu0 %v168
    %187 = vmatprep.subr.mxu0 0.0
    %188 = vmatpush1.msra.mxu0 %v167
    %189 = vmatprep.subr.mxu0 0.0
    %190 = vmatpush1.msra.mxu0 %v166
    %191 = vmatprep.subr.mxu0 0.0
    %192 = vmatpush1.msra.mxu0 %v165
    %193 = vmatprep.subr.mxu0 0.0
    %194 = vmatpush1.msra.mxu0 %v164
    %195 = vmatprep.subr.mxu0 0.0
    %196 = vmatpush1.msra.mxu0 %v163
    %197 = vmatprep.subr.mxu0 0.0
    %198 = vmatpush1.msra.mxu0 %v162
    %199 = vmatprep.subr.mxu0 0.0
    %200 = vmatpush1.msra.mxu0 %v161
    %201 = vmatprep.subr.mxu0 0.0
    %202 = vmatpush1.msra.mxu0 %v160
    %203 = vmatprep.subr.mxu0 0.0
    %204 = vmatpush1.msra.mxu0 %v159
    %205 = vmatprep.subr.mxu0 0.0
    %206 = vmatpush1.msra.mxu0 %v158
    %207 = vmatprep.subr.mxu0 0.0
    %208 = vmatpush1.msra.mxu0 %v157
    %209 = vmatprep.subr.mxu0 0.0
    %210 = vmatpush1.msra.mxu0 %v156
    %211 = vmatprep.subr.mxu0 0.0
    %212 = vmatpush2.msra.mxu0 0.0
    %213 = vmatprep.subr.mxu0 0.0
    %214 = vmatpush2.msra.mxu0 0.0
    %215 = vmatprep.subr.mxu0 0.0
    %216 = vmatpush2.msra.mxu0 0.0
    %217 = vmatprep.subr.mxu0 0.0
    %218 = vmatpush2.msra.mxu0 0.0
    %219 = vmatprep.subr.mxu0 0.0
    %220 = vmatpush2.msra.mxu0 0.0
    %221 = vmatprep.subr.mxu0 0.0
    %222 = vmatpush2.msra.mxu0 0.0
    %223 = vmatprep.subr.mxu0 0.0
    %224 = vmatpush2.msra.mxu0 0.0
    %225 = vmatprep.subr.mxu0 0.0
    %226 = vmatpush2.msra.mxu0 0.0
    %227 = vmatprep.subr.mxu0 0.0
    %228 = vmatpush2.msra.mxu0 0.0
    %229 = vmatprep.subr.mxu0 0.0
    %230 = vmatpush2.msra.mxu0 0.0
    %231 = vmatprep.subr.mxu0 0.0
    %232 = vmatpush2.msra.mxu0 0.0
    %233 = vmatprep.subr.mxu0 0.0
    %234 = vmatpush2.msra.mxu0 0.0
    %235 = vmatprep.subr.mxu0 0.0
    %236 = vmatpush2.msra.mxu0 0.0
    %237 = vmatprep.subr.mxu0 0.0
    %238 = vmatpush2.msra.mxu0 0.0
    %239 = vmatprep.subr.mxu0 0.0
    %240 = vmatpush2.msra.mxu0 0.0
    %241 = vmatprep.subr.mxu0 0.0
    %242 = vmatpush2.msra.mxu0 0.0
    %243 = vmatprep.mubr.f32.mxu0 0.0
    %244 = vmatmul.mubr.f32.gmra.mxu0 %v154
    %v245 = vpop.f32.mrf.mxu0
    %v246 = vadd.f32 %v177, %v245
    %v247 = vpop.f32.mrf.mxu0
    %248 = vmatprep.mubr.f32.mxu0 0.0
    %249 = vmatmul.mubr.f32.gmra.mxu0 %v155
    %v250 = vpop.f32.mrf.mxu0
    %v251 = vadd.f32 %v177, %v250
    %v252 = vpop.f32.mrf.mxu0
    %253 = vdwg.mxu0
    %v254 = vld [vmem:[#allocation5] sm:$0xff]
    %v255 = vld [vmem:[#allocation5 + $0x8] sm:$0xff]
    %v256 = vld [vmem:[#allocation5 + $0x10] sm:$0xff]
    %v257 = vld [vmem:[#allocation5 + $0x18] sm:$0xff]
    %v258 = vld [vmem:[#allocation5 + $0x20] sm:$0xff]
    %v259 = vld [vmem:[#allocation5 + $0x28] sm:$0xff]
    %v260 = vld [vmem:[#allocation5 + $0x30] sm:$0xff]
    %v261 = vld [vmem:[#allocation5 + $0x38] sm:$0xff]
    %v262 = vld [vmem:[#allocation5 + $0x40] sm:$0xff]
    %v263 = vld [vmem:[#allocation5 + $0x48] sm:$0xff]
    %v264 = vld [vmem:[#allocation5 + $0x50] sm:$0xff]
    %v265 = vld [vmem:[#allocation5 + $0x58] sm:$0xff]
    %v266 = vld [vmem:[#allocation5 + $0x60] sm:$0xff]
    %v267 = vld [vmem:[#allocation5 + $0x68] sm:$0xff]
    %v268 = vld [vmem:[#allocation5 + $0x70] sm:$0xff]
    %v269 = vld [vmem:[#allocation5 + $0x78] sm:$0xff]
    %v270 = vld [vmem:[%s6] sm:$0x1]
    %v272 = vlaneseq
    %v273 = vshrl.u32 %v272, 7
    %v274 = vsub.s32 0, %v273
    %v275 = vrot.slane %v270, %v274
    %277 = vmatprep.subr.mxu0 0.0
    %278 = vmatpush1.msra.mxu0 %v269
    %279 = vmatprep.subr.mxu0 0.0
    %280 = vmatpush1.msra.mxu0 %v268
    %281 = vmatprep.subr.mxu0 0.0
    %282 = vmatpush1.msra.mxu0 %v267
    %283 = vmatprep.subr.mxu0 0.0
    %284 = vmatpush1.msra.mxu0 %v266
    %285 = vmatprep.subr.mxu0 0.0
    %286 = vmatpush1.msra.mxu0 %v265
    %287 = vmatprep.subr.mxu0 0.0
    %288 = vmatpush1.msra.mxu0 %v264
    %289 = vmatprep.subr.mxu0 0.0
    %290 = vmatpush1.msra.mxu0 %v263
    %291 = vmatprep.subr.mxu0 0.0
    %292 = vmatpush1.msra.mxu0 %v262
    %293 = vmatprep.subr.mxu0 0.0
    %294 = vmatpush1.msra.mxu0 %v261
    %295 = vmatprep.subr.mxu0 0.0
    %296 = vmatpush1.msra.mxu0 %v260
    %297 = vmatprep.subr.mxu0 0.0
    %298 = vmatpush1.msra.mxu0 %v259
    %299 = vmatprep.subr.mxu0 0.0
    %300 = vmatpush1.msra.mxu0 %v258
    %301 = vmatprep.subr.mxu0 0.0
    %302 = vmatpush1.msra.mxu0 %v257
    %303 = vmatprep.subr.mxu0 0.0
    %304 = vmatpush1.msra.mxu0 %v256
    %305 = vmatprep.subr.mxu0 0.0
    %306 = vmatpush1.msra.mxu0 %v255
    %307 = vmatprep.subr.mxu0 0.0
    %308 = vmatpush1.msra.mxu0 %v254
    %309 = vmatprep.subr.mxu0 0.0
    %310 = vmatpush2.msra.mxu0 0.0
    %311 = vmatprep.subr.mxu0 0.0
    %312 = vmatpush2.msra.mxu0 0.0
    %313 = vmatprep.subr.mxu0 0.0
    %314 = vmatpush2.msra.mxu0 0.0
    %315 = vmatprep.subr.mxu0 0.0
    %316 = vmatpush2.msra.mxu0 0.0
    %317 = vmatprep.subr.mxu0 0.0
    %318 = vmatpush2.msra.mxu0 0.0
    %319 = vmatprep.subr.mxu0 0.0
    %320 = vmatpush2.msra.mxu0 0.0
    %321 = vmatprep.subr.mxu0 0.0
    %322 = vmatpush2.msra.mxu0 0.0
    %323 = vmatprep.subr.mxu0 0.0
    %324 = vmatpush2.msra.mxu0 0.0
    %325 = vmatprep.subr.mxu0 0.0
    %326 = vmatpush2.msra.mxu0 0.0
    %327 = vmatprep.subr.mxu0 0.0
    %328 = vmatpush2.msra.mxu0 0.0
    %329 = vmatprep.subr.mxu0 0.0
    %330 = vmatpush2.msra.mxu0 0.0
    %331 = vmatprep.subr.mxu0 0.0
    %332 = vmatpush2.msra.mxu0 0.0
    %333 = vmatprep.subr.mxu0 0.0
    %334 = vmatpush2.msra.mxu0 0.0
    %335 = vmatprep.subr.mxu0 0.0
    %336 = vmatpush2.msra.mxu0 0.0
    %337 = vmatprep.subr.mxu0 0.0
    %338 = vmatpush2.msra.mxu0 0.0
    %339 = vmatprep.subr.mxu0 0.0
    %340 = vmatpush2.msra.mxu0 0.0
    %341 = vmatprep.mubr.f32.mxu0 0.0
    %342 = vmatmul.mubr.f32.gmra.mxu0 %v246
    %v343 = vpop.f32.mrf.mxu0
    %v344 = vadd.f32 %v275, %v343
    %v345 = vpop.f32.mrf.mxu0
    %346 = vmatprep.mubr.f32.mxu0 0.0
    %347 = vmatmul.mubr.f32.gmra.mxu0 %v251
    %v348 = vpop.f32.mrf.mxu0
    %v349 = vadd.f32 %v275, %v348
    %v350 = vpop.f32.mrf.mxu0
    %351 = vdwg.mxu0
    %v352 = vmax.f32 %v344, 0.0
    %v353 = vmax.f32 %v349, 0.0
    %v354 = vld [vmem:[%s7] sm:$0xff]
    %v355 = vld [vmem:[%s7 + $0x8] sm:$0xff]
    %v356 = vld [vmem:[%s7 + $0x10] sm:$0xff]
    %v357 = vld [vmem:[%s7 + $0x18] sm:$0xff]
    %v358 = vld [vmem:[%s7 + $0x20] sm:$0xff]
    %v359 = vld [vmem:[%s7 + $0x28] sm:$0xff]
    %v360 = vld [vmem:[%s7 + $0x30] sm:$0xff]
    %v361 = vld [vmem:[%s7 + $0x38] sm:$0xff]
    %v362 = vld [vmem:[%s7 + $0x40] sm:$0xff]
    %v363 = vld [vmem:[%s7 + $0x48] sm:$0xff]
    %v364 = vld [vmem:[%s7 + $0x50] sm:$0xff]
    %v365 = vld [vmem:[%s7 + $0x58] sm:$0xff]
    %v366 = vld [vmem:[%s7 + $0x60] sm:$0xff]
    %v367 = vld [vmem:[%s7 + $0x68] sm:$0xff]
    %v368 = vld [vmem:[%s7 + $0x70] sm:$0xff]
    %v369 = vld [vmem:[%s7 + $0x78] sm:$0xff]
    %v370 = vld [vmem:[%s8] sm:$0x1]
    %v372 = vlaneseq
    %v373 = vshrl.u32 %v372, 7
    %v374 = vsub.s32 0, %v373
    %v375 = vrot.slane %v370, %v374
    %377 = vmatprep.subr.mxu0 0.0
    %378 = vmatpush1.msra.mxu0 %v369
    %379 = vmatprep.subr.mxu0 0.0
    %380 = vmatpush1.msra.mxu0 %v368
    %381 = vmatprep.subr.mxu0 0.0
    %382 = vmatpush1.msra.mxu0 %v367
    %383 = vmatprep.subr.mxu0 0.0
    %384 = vmatpush1.msra.mxu0 %v366
    %385 = vmatprep.subr.mxu0 0.0
    %386 = vmatpush1.msra.mxu0 %v365
    %387 = vmatprep.subr.mxu0 0.0
    %388 = vmatpush1.msra.mxu0 %v364
    %389 = vmatprep.subr.mxu0 0.0
    %390 = vmatpush1.msra.mxu0 %v363
    %391 = vmatprep.subr.mxu0 0.0
    %392 = vmatpush1.msra.mxu0 %v362
    %393 = vmatprep.subr.mxu0 0.0
    %394 = vmatpush1.msra.mxu0 %v361
    %395 = vmatprep.subr.mxu0 0.0
    %396 = vmatpush1.msra.mxu0 %v360
    %397 = vmatprep.subr.mxu0 0.0
    %398 = vmatpush1.msra.mxu0 %v359
    %399 = vmatprep.subr.mxu0 0.0
    %400 = vmatpush1.msra.mxu0 %v358
    %401 = vmatprep.subr.mxu0 0.0
    %402 = vmatpush1.msra.mxu0 %v357
    %403 = vmatprep.subr.mxu0 0.0
    %404 = vmatpush1.msra.mxu0 %v356
    %405 = vmatprep.subr.mxu0 0.0
    %406 = vmatpush1.msra.mxu0 %v355
    %407 = vmatprep.subr.mxu0 0.0
    %408 = vmatpush1.msra.mxu0 %v354
    %409 = vmatprep.subr.mxu0 0.0
    %410 = vmatpush2.msra.mxu0 0.0
    %411 = vmatprep.subr.mxu0 0.0
    %412 = vmatpush2.msra.mxu0 0.0
    %413 = vmatprep.subr.mxu0 0.0
    %414 = vmatpush2.msra.mxu0 0.0
    %415 = vmatprep.subr.mxu0 0.0
    %416 = vmatpush2.msra.mxu0 0.0
    %417 = vmatprep.subr.mxu0 0.0
    %418 = vmatpush2.msra.mxu0 0.0
    %419 = vmatprep.subr.mxu0 0.0
    %420 = vmatpush2.msra.mxu0 0.0
    %421 = vmatprep.subr.mxu0 0.0
    %422 = vmatpush2.msra.mxu0 0.0
    %423 = vmatprep.subr.mxu0 0.0
    %424 = vmatpush2.msra.mxu0 0.0
    %425 = vmatprep.subr.mxu0 0.0
    %426 = vmatpush2.msra.mxu0 0.0
    %427 = vmatprep.subr.mxu0 0.0
    %428 = vmatpush2.msra.mxu0 0.0
    %429 = vmatprep.subr.mxu0 0.0
    %430 = vmatpush2.msra.mxu0 0.0
    %431 = vmatprep.subr.mxu0 0.0
    %432 = vmatpush2.msra.mxu0 0.0
    %433 = vmatprep.subr.mxu0 0.0
    %434 = vmatpush2.msra.mxu0 0.0
    %435 = vmatprep.subr.mxu0 0.0
    %436 = vmatpush2.msra.mxu0 0.0
    %437 = vmatprep.subr.mxu0 0.0
    %438 = vmatpush2.msra.mxu0 0.0
    %439 = vmatprep.subr.mxu0 0.0
    %440 = vmatpush2.msra.mxu0 0.0
    %441 = vmatprep.mubr.f32.mxu0 0.0
    %442 = vmatmul.mubr.f32.gmra.mxu0 %v352
    %v443 = vpop.f32.mrf.mxu0
    %v444 = vadd.f32 %v375, %v443
    %v445 = vpop.f32.mrf.mxu0
    %446 = vmatprep.mubr.f32.mxu0 0.0
    %447 = vmatmul.mubr.f32.gmra.mxu0 %v353
    %v448 = vpop.f32.mrf.mxu0
    %v449 = vadd.f32 %v375, %v448
    %v450 = vpop.f32.mrf.mxu0
    %451 = vdwg.mxu0
    %452 = vst.msk [vmem:[#allocation7] sm:$0xff] %vm72, %v444
    %453 = vst.msk [vmem:[#allocation7 + $0x8] sm:$0xff] %vm72, %v449
    // Predicated region
    $region46: #{tpu_custom_call.1} parent=1 // pred_check
      _
    $region47: #{tpu_custom_call.1} parent=1 // pred_check_branch
      %455 = sbr.rel (0) target = $region49
    $region48: #{tpu_custom_call.1} parent=1 // pred_region
      %s457 = ssub.s32 256, 256
      %458 = vsyncadd [#allocation4], %s457
      %s459 = sshll.u32 [#allocation7], 4
      %s460 = int_to_ptr.vmem [resolvable:$true] %s459
      %465 = dma.vmem_to_hbm [thread:$0]  %s460, 256, %s9, [#allocation4], 128, 128, 8
    $region49: #{tpu_custom_call.1} parent=1 // pred_fallthru
      _
    // Predicated region
    $region50: #{tpu_custom_call.1} parent=1 // pred_check
      _
    $region51: #{tpu_custom_call.1} parent=1 // pred_check_branch
      %467 = sbr.rel (0) target = $region53
    $region52: #{tpu_custom_call.1} parent=1 // pred_region
      %468 = dma.done [#allocation4], 256
    $region53: #{tpu_custom_call.1} parent=1 // pred_fallthru
      _
    %469 = vsyncpa [#allocation3], 1
    %470 = vsyncpa [#allocation6], 1
    %471 = vsyncpa [#allocation4], 1

</llo_original>
